<compile_context>
chip_gen: v6e
topology: v6e:2x2x1
jax: 0.10.0
libtpu: 0.0.40
codegen_flags: <defaults>
</compile_context>

<pallas_src>
import functools
import math

import jax
import jax.numpy as jnp
from jax.experimental import pallas as pl
from jax.experimental.pallas import tpu as pltpu


def _round_up(x, m):
    return ((x + m - 1) // m) * m


def _vmem_capacity_bytes():
    try:
        return int(pltpu.get_tpu_info().vmem_capacity_bytes)
    except Exception:
        return 64 << 20  # conservative: v7x per-TensorCore VMEM


def _use_bf16_exp():
    # bf16 EUP exists on v6e / v7x; keep all softmax elementwise math f32 on v5e.
    try:
        kind = jax.devices()[0].device_kind.lower()
    except Exception:
        return False
    return ("v6" in kind) or ("v7" in kind) or ("7x" in kind)


_LINEAR_VMEM_LIMIT = 32 << 20          # safe on v5e/v6e/v7x; raises v5e's 16 MiB default
_RESIDENT_VMEM_BUDGET = 26 << 20       # keep weight-resident path under the limit


# -----------------------------------------------------------------------------
# Linear kernels:  y = x @ W_t + b   (W_t stored [D_in, D_out], bf16)
# -----------------------------------------------------------------------------
def _resident_linear_kernel(x_ref, w_ref, b_ref, o_ref):
    # Whole weight is VMEM-resident (constant block index); one MXU dot per step.
    x = x_ref[...].astype(jnp.bfloat16)
    r = jnp.dot(x, w_ref[...], preferred_element_type=jnp.float32) + b_ref[...]
    o_ref[...] = r.astype(o_ref.dtype)


def _resident_linear_kv_kernel(x_ref, w_ref, b_ref, ok_ref, ov_ref):
    # Fused K/V projection: one dot against the concatenated weight, two outputs
    # (avoids a post-hoc HBM slice copy of the fused activation).
    x = x_ref[...].astype(jnp.bfloat16)
    r = jnp.dot(x, w_ref[...], preferred_element_type=jnp.float32) + b_ref[...]
    d = ok_ref.shape[-1]
    ok_ref[...] = r[:, :d].astype(ok_ref.dtype)
    ov_ref[...] = r[:, d:].astype(ov_ref.dtype)


def _tiled_linear_kernel(x_ref, w_ref, b_ref, o_ref, acc_ref):
    k = pl.program_id(2)

    @pl.when(k == 0)
    def _():
        acc_ref[...] = jnp.zeros_like(acc_ref)

    acc_ref[...] += jnp.dot(x_ref[...].astype(jnp.bfloat16), w_ref[...],
                            preferred_element_type=jnp.float32)

    @pl.when(k == pl.num_programs(2) - 1)
    def _():
        o_ref[...] = (acc_ref[...] + b_ref[...]).astype(o_ref.dtype)


def _resident_vmem_bytes(tm, K, D, x_itemsize, o_itemsize):
    return (2 * K * D * 2               # double-buffered bf16 weight
            + 2 * tm * K * x_itemsize   # double-buffered x tile
            + 2 * tm * D * o_itemsize   # double-buffered out tile
            + tm * D * 4                # f32 matmul result temp
            + 2 * D * 4)                # bias


def linear(x2d, weight_t, bias, *, out_dtype=jnp.float32,
           tm_cap=512, tn_cap=512, tk_cap=512):
    """x2d: [N, D_in]; weight_t: [D_in, D_out] bf16; bias: [D_out] f32 -> [N, D_out]."""
    N, D_in = x2d.shape
    D_out = weight_t.shape[1]
    bias2d = bias.reshape(1, D_out).astype(jnp.float32)

    tm = N if N <= tm_cap else tm_cap
    x_it = jnp.dtype(x2d.dtype).itemsize
    o_it = jnp.dtype(out_dtype).itemsize

    if _resident_vmem_bytes(tm, D_in, D_out, x_it, o_it) <= _RESIDENT_VMEM_BUDGET:
        Np = _round_up(N, tm)
        xp = jnp.pad(x2d, ((0, Np - N), (0, 0))) if Np != N else x2d
        out = pl.pallas_call(
            _resident_linear_kernel,
            grid=(Np // tm,),
            in_specs=[
                pl.BlockSpec((tm, D_in), lambda i: (i, 0)),
                pl.BlockSpec((D_in, D_out), lambda i: (0, 0)),   # weight stays resident
                pl.BlockSpec((1, D_out), lambda i: (0, 0)),
            ],
            out_specs=pl.BlockSpec((tm, D_out), lambda i: (i, 0)),
            out_shape=jax.ShapeDtypeStruct((Np, D_out), out_dtype),
            compiler_params=pltpu.CompilerParams(
                dimension_semantics=("parallel",),
                vmem_limit_bytes=_LINEAR_VMEM_LIMIT),
        )(xp, weight_t, bias2d)
        return out[:N] if Np != N else out

    # Tiled fallback (large weights): 3-D grid with f32 VMEM accumulator.
    tn = D_out if D_out <= tn_cap else tn_cap
    tk = D_in if D_in <= tk_cap else tk_cap
    Np, Kp, Dp = _round_up(N, tm), _round_up(D_in, tk), _round_up(D_out, tn)
    xp = jnp.pad(x2d, ((0, Np - N), (0, Kp - D_in))) if (Np, Kp) != (N, D_in) else x2d
    wp = (jnp.pad(weight_t, ((0, Kp - D_in), (0, Dp - D_out)))
          if (Kp, Dp) != (D_in, D_out) else weight_t)
    bp = jnp.pad(bias2d, ((0, 0), (0, Dp - D_out))) if Dp != D_out else bias2d

    out = pl.pallas_call(
        _tiled_linear_kernel,
        grid=(Np // tm, Dp // tn, Kp // tk),
        in_specs=[
            pl.BlockSpec((tm, tk), lambda i, j, k: (i, k)),
            pl.BlockSpec((tk, tn), lambda i, j, k: (k, j)),
            pl.BlockSpec((1, tn), lambda i, j, k: (0, j)),
        ],
        out_specs=pl.BlockSpec((tm, tn), lambda i, j, k: (i, j)),
        out_shape=jax.ShapeDtypeStruct((Np, Dp), out_dtype),
        scratch_shapes=[pltpu.VMEM((tm, tn), jnp.float32)],
        compiler_params=pltpu.CompilerParams(
            dimension_semantics=("parallel", "parallel", "arbitrary"),
            vmem_limit_bytes=_LINEAR_VMEM_LIMIT),
    )(xp, wp, bp)
    return out[:N, :D_out]


def linear_kv(x2d, wkv_t, bkv, d_model, *, out_dtype=jnp.bfloat16, tm_cap=512):
    """Fused K/V projection. Returns (k2d, v2d), each [N, d_model]."""
    N, D_in = x2d.shape
    D2 = wkv_t.shape[1]  # 2 * d_model
    bias2d = bkv.reshape(1, D2).astype(jnp.float32)
    tm = N if N <= tm_cap else tm_cap
    x_it = jnp.dtype(x2d.dtype).itemsize
    o_it = jnp.dtype(out_dtype).itemsize

    if _resident_vmem_bytes(tm, D_in, D2, x_it, o_it) <= _RESIDENT_VMEM_BUDGET:
        Np = _round_up(N, tm)
        xp = jnp.pad(x2d, ((0, Np - N), (0, 0))) if Np != N else x2d
        k2d, v2d = pl.pallas_call(
            _resident_linear_kv_kernel,
            grid=(Np // tm,),
            in_specs=[
                pl.BlockSpec((tm, D_in), lambda i: (i, 0)),
                pl.BlockSpec((D_in, D2), lambda i: (0, 0)),
                pl.BlockSpec((1, D2), lambda i: (0, 0)),
            ],
            out_specs=[
                pl.BlockSpec((tm, d_model), lambda i: (i, 0)),
                pl.BlockSpec((tm, d_model), lambda i: (i, 0)),
            ],
            out_shape=[
                jax.ShapeDtypeStruct((Np, d_model), out_dtype),
                jax.ShapeDtypeStruct((Np, d_model), out_dtype),
            ],
            compiler_params=pltpu.CompilerParams(
                dimension_semantics=("parallel",),
                vmem_limit_bytes=_LINEAR_VMEM_LIMIT),
        )(xp, wkv_t, bias2d)
        if Np != N:
            k2d, v2d = k2d[:N], v2d[:N]
        return k2d, v2d

    # Fallback for very large d_model: tiled fused projection + slices.
    kv2d = linear(x2d, wkv_t, bkv, out_dtype=out_dtype)
    return kv2d[:, :d_model], kv2d[:, d_model:]


# -----------------------------------------------------------------------------
# SDPA kernel: one (batch, head-block, q-tile) per grid step, [B, S, d_model] layout
# -----------------------------------------------------------------------------
def _sdpa_kernel(q_ref, k_ref, v_ref, bias_ref, o_ref, w_ref, *, hblk, dk, bf16_exp):
    # q: [1, tq, hblk*dk] bf16 (1/sqrt(dk) already folded into the Q projection)
    # k/v: [1, Sk, hblk*dk] bf16; bias: [1, 1|tq, Sk] additive f32
    # o: [1, tq, hblk*dk] bf16 (lane-dense store); w: [1, hblk, tq, Sk] f32
    bias = bias_ref[0]
    for h in range(hblk):                       # static unroll over the head block
        lo, hi = h * dk, (h + 1) * dk
        qh = q_ref[0, :, lo:hi]                 # (tq, dk)
        kh = k_ref[0, :, lo:hi]                 # (Sk, dk)
        vh = v_ref[0, :, lo:hi]                 # (Sk, dk)

        # scores: contract over dk (no materialized transpose of kh)
        s = jax.lax.dot_general(qh, kh, (((1,), (1,)), ((), ())),
                                preferred_element_type=jnp.float32)
        s = s + bias

        # numerically stable softmax (bf16 exp only on chips with a bf16 EUP)
        m = jnp.max(s, axis=-1, keepdims=True)
        x = s - m
        if bf16_exp:
            e = jnp.exp(x.astype(jnp.bfloat16)).astype(jnp.float32)
        else:
            e = jnp.exp(x)
        denom = jnp.sum(e, axis=-1, keepdims=True)
        # exact normalization: these weights are returned by the module.
        # Note: a fully-masked row degenerates to uniform weights (same as PyTorch ref).
        p = e * (1.0 / denom)

        out_h = jnp.dot(p.astype(jnp.bfloat16), vh,
                        preferred_element_type=jnp.float32)
        o_ref[0, :, lo:hi] = out_h.astype(o_ref.dtype)
        w_ref[0, h] = p


def _sdpa_vmem_bytes(tq, Sk, hblk, dk, mtile):
    hd = hblk * dk
    io = 2 * (tq * hd * 2            # q (bf16), double-buffered
              + 2 * Sk * hd * 2      # k + v (bf16)
              + mtile * Sk * 4       # bias (f32)
              + tq * hd * 2          # o (bf16)
              + hblk * tq * Sk * 4)  # attention weights (f32) — largest stream
    temps = 4 * tq * Sk * 4 + 2 * tq * hd * 4
    return io + temps


def scaled_dot_product_attention(q, k, v, bias, num_heads, *, tq_cap=256):
    """
    q: [B,Sq,d_model], k/v: [B,Sk,d_model] (bf16, q pre-scaled by 1/sqrt(dk));
    bias: [B, 1|Sq, Sk] additive f32 mask bias.
    Returns (out [B,Sq,d_model] bf16, weights [B,H,Sq,Sk] f32).
    """
    B, Sq, d_model = q.shape
    Sk = k.shape[1]
    H = num_heads
    assert d_model % H == 0
    dk = d_model // H
    mSq = bias.shape[1]

    tq = Sq if Sq <= tq_cap else tq_cap
    Sq_p = _round_up(Sq, tq)
    if Sq_p != Sq:
        q = jnp.pad(q, ((0, 0), (0, Sq_p - Sq), (0, 0)))
        if mSq != 1:
            bias = jnp.pad(bias, ((0, 0), (0, Sq_p - Sq), (0, 0)))
    per_query = (mSq != 1)
    mtile = tq if per_query else 1

    # head-block selection: must be layout-valid (lane-dense hblk*dk block, or the
    # full head dim) and fit an honest double-buffered VMEM budget.
    vmem_cap = _vmem_capacity_bytes()
    budget = min(16 << 20, vmem_cap // 4)
    divisors = [d for d in range(1, H + 1) if H % d == 0]
    valid = [d for d in divisors if (d * dk) % 128 == 0 or d == H]
    hblk = None
    for d in sorted(valid, reverse=True):
        if _sdpa_vmem_bytes(tq, Sk, d, dk, mtile) <= budget:
            hblk = d
            break
    if hblk is None:
        hblk = min(valid)  # layout-valid but over budget; bump the limit below
    est = _sdpa_vmem_bytes(tq, Sk, hblk, dk, mtile)
    vmem_limit = int(min(max(32 << 20, est + (4 << 20)), vmem_cap - (8 << 20)))

    n_hblk = H // hblk
    hd = hblk * dk

    # grid flattened over (batch, head-block) so megacore sharding is even on v7x.
    def q_idx(bh, qi):
        return (bh // n_hblk, qi, bh % n_hblk)

    def kv_idx(bh, qi):
        return (bh // n_hblk, 0, bh % n_hblk)

    def b_idx(bh, qi):
        return (bh // n_hblk, qi if per_query else 0, 0)

    def o_idx(bh, qi):
        return (bh // n_hblk, qi, bh % n_hblk)

    def w_idx(bh, qi):
        return (bh // n_hblk, bh % n_hblk, qi, 0)

    kernel = functools.partial(_sdpa_kernel, hblk=hblk, dk=dk,
                               bf16_exp=_use_bf16_exp())

    out, weights = pl.pallas_call(
        kernel,
        grid=(B * n_hblk, Sq_p // tq),
        in_specs=[
            pl.BlockSpec((1, tq, hd), q_idx),
            pl.BlockSpec((1, Sk, hd), kv_idx),
            pl.BlockSpec((1, Sk, hd), kv_idx),
            pl.BlockSpec((1, mtile, Sk), b_idx),
        ],
        out_specs=[
            pl.BlockSpec((1, tq, hd), o_idx),
            pl.BlockSpec((1, hblk, tq, Sk), w_idx),
        ],
        out_shape=[
            jax.ShapeDtypeStruct((B, Sq_p, d_model), jnp.bfloat16),
            jax.ShapeDtypeStruct((B, H, Sq_p, Sk), jnp.float32),
        ],
        compiler_params=pltpu.CompilerParams(
            dimension_semantics=("parallel", "parallel"),
            vmem_limit_bytes=vmem_limit),
    )(q, k, v, bias)

    if Sq_p != Sq:
        out = out[:, :Sq]
        weights = weights[:, :, :Sq]
    return out, weights


# -----------------------------------------------------------------------------
# CrossAttention forward (glue in plain JAX, hot paths in Pallas)
# -----------------------------------------------------------------------------
class CrossAttentionParams:
    """Kernel weights: bf16, pre-transposed [D_in, D_out], K/V fused, 1/sqrt(dk)
    folded into the Q projection.  f32 originals kept for the reference check."""

    def __init__(self, d_model, num_heads, key):
        if d_model % num_heads != 0:
            raise ValueError("d_model must be divisible by num_heads")
        self.d_model = d_model
        self.num_heads = num_heads
        self.d_k = d_model // num_heads

        ks = jax.random.split(key, 8)
        lim = 1.0 / math.sqrt(d_model)  # nn.Linear default init range

        def w_t(k):  # nn.Linear weight [D_out, D_in], stored transposed [D_in, D_out]
            return jax.random.uniform(k, (d_model, d_model), jnp.float32, -lim, lim).T

        def b(k):
            return jax.random.uniform(k, (d_model,), jnp.float32, -lim, lim)

        wq_t, bq = w_t(ks[0]), b(ks[1])
        wk_t, bk = w_t(ks[2]), b(ks[3])
        wv_t, bv = w_t(ks[4]), b(ks[5])
        wo_t, bo = w_t(ks[6]), b(ks[7])

        # f32 module weights (exact PyTorch semantics) for the reference check
        self.ref = dict(wq_t=wq_t, bq=bq, wk_t=wk_t, bk=bk,
                        wv_t=wv_t, bv=bv, wo_t=wo_t, bo=bo)

        scale = 1.0 / math.sqrt(self.d_k)
        self.wq_wt = (wq_t * scale).astype(jnp.bfloat16)
        self.wq_b = (bq * scale).astype(jnp.float32)
        self.wkv_wt = jnp.concatenate([wk_t, wv_t], axis=1).astype(jnp.bfloat16)
        self.wkv_b = jnp.concatenate([bk, bv], axis=0).astype(jnp.float32)
        self.wo_wt = wo_t.astype(jnp.bfloat16)
        self.wo_b = bo.astype(jnp.float32)


def cross_attention(params, query, key_value, mask=None):
    """
    query: [B, Sq, d_model]; key_value: [B, Sk, d_model]
    mask: None, [B,1,1,Sk] or [B,1,Sq,Sk] with 1 = keep, 0 = mask.
    Returns (output [B, Sq, d_model] f32, attention_weights [B, H, Sq, Sk] f32).
    """
    B, Sq, d_model = query.shape
    Sk = key_value.shape[1]
    H = params.num_heads

    # projections (Pallas), bf16 activations; K/V fused, emitted as two outputs
    q2d = linear(query.reshape(B * Sq, d_model), params.wq_wt, params.wq_b,
                 out_dtype=jnp.bfloat16)
    k2d, v2d = linear_kv(key_value.reshape(B * Sk, d_model), params.wkv_wt,
                         params.wkv_b, d_model, out_dtype=jnp.bfloat16)

    # [B, S, d_model] layout everywhere — no head split/merge transposes in HBM
    q3 = q2d.reshape(B, Sq, d_model)
    k3 = k2d.reshape(B, Sk, d_model)
    v3 = v2d.reshape(B, Sk, d_model)

    # mask -> compact additive bias [B, 1|Sq, Sk]
    if mask is None:
        bias = jnp.zeros((B, 1, Sk), jnp.float32)
    else:
        m = mask.astype(jnp.float32).reshape(B, -1, Sk)
        bias = jnp.where(m == 0, jnp.float32(-1e9), jnp.float32(0.0))

    attn_out, attn_weights = scaled_dot_product_attention(q3, k3, v3, bias, H)

    output = linear(attn_out.reshape(B * Sq, d_model), params.wo_wt, params.wo_b,
                    out_dtype=jnp.float32)
    output = output.reshape(B, Sq, d_model)
    # TODO(synk): training-mode nn.Dropout not implemented (eval-mode identity).
    return output, attn_weights


# -----------------------------------------------------------------------------
# Pure-JAX reference (f32, exact module semantics) for correctness check
# -----------------------------------------------------------------------------
def _reference(params, query, key_value, mask):
    B, Sq, d_model = query.shape
    Sk = key_value.shape[1]
    H, dk = params.num_heads, params.d_k
    r = params.ref
    q = query @ r['wq_t'] + r['bq']
    k = key_value @ r['wk_t'] + r['bk']
    v = key_value @ r['wv_t'] + r['bv']
    q = q.reshape(B, Sq, H, dk).transpose(0, 2, 1, 3)
    k = k.reshape(B, Sk, H, dk).transpose(0, 2, 1, 3)
    v = v.reshape(B, Sk, H, dk).transpose(0, 2, 1, 3)
    s = jnp.einsum('bhqd,bhkd->bhqk', q, k) / math.sqrt(dk)
    if mask is not None:
        s = jnp.where(mask == 0, jnp.float32(-1e9), s)
    w = jax.nn.softmax(s, axis=-1)
    o = jnp.einsum('bhqk,bhkd->bhqd', w, v)
    o = o.transpose(0, 2, 1, 3).reshape(B, Sq, d_model)
    return o @ r['wo_t'] + r['bo'], w


if __name__ == "__main__":
    # small config: d_model=32, num_heads=4, batch=2, seq=8
    d_model, num_heads = 32, 4
    B, Sq, Skv = 2, 8, 8

    root = jax.random.PRNGKey(0)
    k_params, k_q, k_kv = jax.random.split(root, 3)

    params = CrossAttentionParams(d_model, num_heads, k_params)
    query = jax.random.normal(k_q, (B, Sq, d_model), jnp.float32)
    key_value = jax.random.normal(k_kv, (B, Skv, d_model), jnp.float32)

    # padding mask: mask out last two key positions of batch element 1
    mask = jnp.ones((B, 1, 1, Skv), jnp.float32).at[1, 0, 0, -2:].set(0.0)

    output, attn_weights = cross_attention(params, query, key_value, mask)
    jax.block_until_ready((output, attn_weights))

    assert output.shape == (B, Sq, d_model)
    assert attn_weights.shape == (B, num_heads, Sq, Skv)
    # softmax rows sum to ~1 (exact normalization in-kernel)
    assert jnp.allclose(jnp.sum(attn_weights, axis=-1), 1.0, atol=2e-3)
    # masked key positions receive (near) zero weight
    assert float(jnp.max(attn_weights[1, :, :, -2:])) < 1e-6

    ref_out, ref_w = _reference(params, query, key_value, mask)
    assert jnp.allclose(output, ref_out, atol=6e-2, rtol=6e-2)
    assert jnp.allclose(attn_weights, ref_w, atol=3e-2)

    print("KERNEL_OK")
</pallas_src>

<mosaic_0001>
module attributes {stable_mosaic.version = 11 : i64} {
  func.func @_resident_linear_kernel(%arg0: i32, %arg1: memref<16x32xf32, #tpu.memory_space<vmem>>, %arg2: memref<32x32xbf16, #tpu.memory_space<vmem>>, %arg3: memref<1x32xf32, #tpu.memory_space<vmem>>, %arg4: memref<16x32xbf16, #tpu.memory_space<vmem>>) attributes {dimension_semantics = [#tpu.dimension_semantics<parallel>], iteration_bounds = array<i64: 1>, scalar_prefetch = 0 : i64, scratch_operands = 0 : i64, tpu.core_type = #tpu.core_type<tc>, window_params = [{transform_indices = @transform_0, window_bounds = array<i64: 16, 32>}, {pipeline_mode = #tpu.pipeline_mode<synchronous>, transform_indices = @transform_1, window_bounds = array<i64: 32, 32>}, {pipeline_mode = #tpu.pipeline_mode<synchronous>, transform_indices = @transform_2, window_bounds = array<i64: 1, 32>}, {transform_indices = @transform_3, window_bounds = array<i64: 16, 32>}]} {
    %c0 = arith.constant 0 : index
    %c0_0 = arith.constant 0 : index
    %0 = vector.load %arg1[%c0, %c0_0] : memref<16x32xf32, #tpu.memory_space<vmem>>, vector<16x32xf32>
    %1 = arith.truncf %0 : vector<16x32xf32> to vector<16x32xbf16>
    %c0_1 = arith.constant 0 : index
    %c0_2 = arith.constant 0 : index
    %2 = vector.load %arg2[%c0_1, %c0_2] : memref<32x32xbf16, #tpu.memory_space<vmem>>, vector<32x32xbf16>
    %cst = arith.constant dense<0.000000e+00> : vector<16x32xf32>
    %3 = tpu.matmul %1, %2, %cst {dimension_numbers = #tpu.dot_dimension_numbers<[1], [0], [0], [1], [0, 0, 1, 1], [], []>} : vector<16x32xbf16>, vector<32x32xbf16>, vector<16x32xf32> -> vector<16x32xf32>
    %c0_3 = arith.constant 0 : index
    %c0_4 = arith.constant 0 : index
    %4 = vector.load %arg3[%c0_3, %c0_4] : memref<1x32xf32, #tpu.memory_space<vmem>>, vector<1x32xf32>
    %5 = vector.broadcast %4 : vector<1x32xf32> to vector<16x32xf32>
    %6 = arith.addf %3, %5 : vector<16x32xf32>
    %7 = arith.truncf %6 : vector<16x32xf32> to vector<16x32xbf16>
    %c0_5 = arith.constant 0 : index
    %c0_6 = arith.constant 0 : index
    %8 = vector.load %arg4[%c0_5, %c0_6] : memref<16x32xbf16, #tpu.memory_space<vmem>>, vector<16x32xbf16>
    tpu.vector_store %arg4[%c0_5, %c0_6], %7 {strides = array<i32>} : memref<16x32xbf16, #tpu.memory_space<vmem>>, vector<16x32xbf16>,
    return
  }
  func.func @transform_0(%arg0: i32) -> (i32, i32) {
    %c0_i32 = arith.constant 0 : i32
    %c0_i32_0 = arith.constant 0 : i32
    return %arg0, %c0_i32 : i32, i32
  }
  func.func @transform_1(%arg0: i32) -> (i32, i32) {
    %c0_i32 = arith.constant 0 : i32
    %c0_i32_0 = arith.constant 0 : i32
    %c0_i32_1 = arith.constant 0 : i32
    return %c0_i32, %c0_i32_0 : i32, i32
  }
  func.func @transform_2(%arg0: i32) -> (i32, i32) {
    %c0_i32 = arith.constant 0 : i32
    %c0_i32_0 = arith.constant 0 : i32
    %c0_i32_1 = arith.constant 0 : i32
    return %c0_i32, %c0_i32_0 : i32, i32
  }
  func.func @transform_3(%arg0: i32) -> (i32, i32) {
    %c0_i32 = arith.constant 0 : i32
    %c0_i32_0 = arith.constant 0 : i32
    return %arg0, %c0_i32 : i32, i32
  }
}

</mosaic_0001>

<llo_original>
// kernel: tpu_custom_call.1
$region0: #{tpu_custom_call.1}
  #allocation0 [shape = 'u32[]', space=smem, size = 0x4, offset = 0x4, fixed_abs, tag = 'smem constant byte address 0x4 - core index']
  #allocation1 [shape = 'u32[144,128]{1,0:T(1,128)}', space=vmem, size = 0x12000, scoped, tag = 'internal scratch']
  %s0 = inlined_call_operand.hbm [shape: f32[16,32], index: 0, kind: input, shape index: {}]
  %s1 = inlined_call_operand.hbm [shape: bf16[32,32], index: 1, kind: input, shape index: {}]
  %s2 = inlined_call_operand.vmem [shape: f32[1,32], index: 2, kind: input, shape index: {}]
  %s3 = inlined_call_operand.hbm [shape: bf16[16,32], index: 3, kind: output, shape index: {}]
  %s4 = sld [smem:[#allocation0]]
  $region30: #{tpu_custom_call.1} parent=0
    _
  %s6 = ssub.s32 1, %s4
  %s7 = scalar_select 0, %s6, %s4
  $region1: #{tpu_custom_call.1} parent=0
    #allocation2 [shape = 'u8[8192]{0}', space=vmem, size = 0x2000, scoped, tag = 'input window, operand 0, single buffered']
    #allocation3 [shape = 's32[1]{0}', space=sflag, size = 0x4, scoped, tag = 'scoped memory for tpu_custom_call.1']
    #allocation4 [shape = 's32[1]{0}', space=sflag, size = 0x4, scoped, tag = 'scoped memory for tpu_custom_call.1']
    #allocation5 [shape = 'u8[8192]{0}', space=vmem, size = 0x2000, scoped, tag = 'input window, operand 1, single buffered']
    #allocation6 [shape = 's32[1]{0}', space=sflag, size = 0x4, scoped, tag = 'scoped memory for tpu_custom_call.1']
    #allocation7 [shape = 'u8[4096]{0}', space=vmem, size = 0x1000, scoped, tag = 'output window, operand 0, single buffered']
    %8 = vsyncpa [#allocation3], 0
    %9 = vsyncpa [#allocation6], 0
    %10 = vsyncpa [#allocation4], 0
    // Predicated region
    $region2: #{tpu_custom_call.1} parent=1 // pred_check
      _
    $region3: #{tpu_custom_call.1} parent=1 // pred_check_branch
      %12 = sbr.rel (0) target = $region5
    $region4: #{tpu_custom_call.1} parent=1 // pred_region
      %s14 = ssub.s32 256, 256
      %15 = vsyncadd [#allocation3], %s14
      %s16 = sshll.u32 [#allocation2], 4
      %s17 = int_to_ptr.vmem [resolvable:$true] %s16
      %22 = dma.hbm_to_vmem [thread:$0]  %s0, 256, %s17, [#allocation3], 128, 128, 8
    $region5: #{tpu_custom_call.1} parent=1 // pred_fallthru
      _
    // Predicated region
    $region6: #{tpu_custom_call.1} parent=1 // pred_check
      _
    $region7: #{tpu_custom_call.1} parent=1 // pred_check_branch
      %24 = sbr.rel (0) target = $region9
    $region8: #{tpu_custom_call.1} parent=1 // pred_region
      %s26 = ssub.s32 256, 256
      %27 = vsyncadd [#allocation6], %s26
      %s28 = sshll.u32 [#allocation5], 4
      %s29 = int_to_ptr.vmem [resolvable:$true] %s28
      %34 = dma.hbm_to_vmem [thread:$0]  %s1, 256, %s29, [#allocation6], 64, 64, 4
    $region9: #{tpu_custom_call.1} parent=1 // pred_fallthru
      _
    // Predicated region
    $region10: #{tpu_custom_call.1} parent=1 // pred_check
      _
    $region11: #{tpu_custom_call.1} parent=1 // pred_check_branch
      %36 = sbr.rel (0) target = $region13
    $region12: #{tpu_custom_call.1} parent=1 // pred_region
      _
    $region13: #{tpu_custom_call.1} parent=1 // pred_fallthru
      _
    // Predicated region
    $region14: #{tpu_custom_call.1} parent=1 // pred_check
      _
    $region15: #{tpu_custom_call.1} parent=1 // pred_check_branch
      %38 = sbr.rel (0) target = $region17
    $region16: #{tpu_custom_call.1} parent=1 // pred_region
      %39 = dma.done [#allocation3], 256
    $region17: #{tpu_custom_call.1} parent=1 // pred_fallthru
      _
    // Predicated region
    $region18: #{tpu_custom_call.1} parent=1 // pred_check
      _
    $region19: #{tpu_custom_call.1} parent=1 // pred_check_branch
      %41 = sbr.rel (0) target = $region21
    $region20: #{tpu_custom_call.1} parent=1 // pred_region
      %42 = dma.done [#allocation6], 256
    $region21: #{tpu_custom_call.1} parent=1 // pred_fallthru
      _
    %v44 = vld [vmem:[#allocation2] sm:$0xff]
    %v45 = vld [vmem:[#allocation2 + $0x8] sm:$0xff]
    %v46 = vpack.c.bf16 %v45, %v44
    %v47 = vld [vmem:[#allocation5] sm:$0xf]
    %v48 = vld [vmem:[#allocation5 + $0x4] sm:$0xf]
    %v49 = vld [vmem:[#allocation5 + $0x8] sm:$0xf]
    %v50 = vld [vmem:[#allocation5 + $0xc] sm:$0xf]
    %v51 = vld [vmem:[%s2] sm:$0x1]
    %v53 = vlaneseq
    %v54 = vshrl.u32 %v53, 7
    %v55 = vsub.s32 0, %v54
    %v56 = vrot.slane %v51, %v55
    %v62 = vunpack.c.l.b16 %v47
    %v63 = vunpack.c.l.b16 %v48
    %v64 = vunpack.c.l.b16 %v49
    %v65 = vunpack.c.l.b16 %v50
    %v66 = vpack.c.b16 %v63, %v62
    %v67 = vpack.c.b16 %v65, %v64
    %vm70 = vcmask 261120
    %v72 = vsel %vm70, %v46, 0
    %74 = vmatprep.subr.bf16.mxu0 0
    %75 = vmatpush1.bf16.msra.mxu0 0
    %76 = vmatprep.subr.bf16.mxu0 0
    %77 = vmatpush1.bf16.msra.mxu0 0
    %78 = vmatprep.subr.bf16.mxu0 0
    %79 = vmatpush1.bf16.msra.mxu0 0
    %80 = vmatprep.subr.bf16.mxu0 0
    %81 = vmatpush1.bf16.msra.mxu0 0
    %82 = vmatprep.subr.bf16.mxu0 0
    %83 = vmatpush1.bf16.msra.mxu0 0
    %84 = vmatprep.subr.bf16.mxu0 0
    %85 = vmatpush1.bf16.msra.mxu0 0
    %86 = vmatprep.subr.bf16.mxu0 0
    %87 = vmatpush1.bf16.msra.mxu0 %v67
    %88 = vmatprep.subr.bf16.mxu0 0
    %89 = vmatpush1.bf16.msra.mxu0 %v66
    %90 = vmatprep.subr.bf16.mxu0 0
    %91 = vmatpush2.bf16.msra.mxu0 0
    %92 = vmatprep.subr.bf16.mxu0 0
    %93 = vmatpush2.bf16.msra.mxu0 0
    %94 = vmatprep.subr.bf16.mxu0 0
    %95 = vmatpush2.bf16.msra.mxu0 0
    %96 = vmatprep.subr.bf16.mxu0 0
    %97 = vmatpush2.bf16.msra.mxu0 0
    %98 = vmatprep.subr.bf16.mxu0 0
    %99 = vmatpush2.bf16.msra.mxu0 0
    %100 = vmatprep.subr.bf16.mxu0 0
    %101 = vmatpush2.bf16.msra.mxu0 0
    %102 = vmatprep.subr.bf16.mxu0 0
    %103 = vmatpush2.bf16.msra.mxu0 0
    %104 = vmatprep.subr.bf16.mxu0 0
    %105 = vmatpush2.bf16.msra.mxu0 0
    %106 = vmatprep.mubr.bf16.mxu0 0
    %107 = vmatmul.mubr.bf16.gmra.mxu0 %v72
    %v108 = vpop.f32.mrf.mxu0
    %v109 = vadd.f32 %v56, %v108
    %v110 = vpop.f32.mrf.mxu0
    %v111 = vpop.f32.mrf.mxu0
    %v112 = vadd.f32 %v56, %v111
    %v113 = vpop.f32.mrf.mxu0
    %114 = vdwg.mxu0
    %v115 = vpack.c.bf16 %v112, %v109
    %v117 = vunpack.c.l.b16 %v115
    %v118 = vunpack.c.h.b16 %v115
    %v119 = vpack.c.b16 %v117, %v117
    %v120 = vpack.c.b16 %v118, %v118
    %vm123 = vcmask 257024
    %124 = vst.msk [vmem:[#allocation7] sm:$0xf] %vm123, %v119
    %125 = vst.msk [vmem:[#allocation7 + $0x4] sm:$0xf] %vm123, %v120
    // Predicated region
    $region22: #{tpu_custom_call.1} parent=1 // pred_check
      _
    $region23: #{tpu_custom_call.1} parent=1 // pred_check_branch
      %127 = sbr.rel (0) target = $region25
    $region24: #{tpu_custom_call.1} parent=1 // pred_region
      %s129 = ssub.s32 128, 128
      %130 = vsyncadd [#allocation4], %s129
      %s131 = sshll.u32 [#allocation7], 4
      %s132 = int_to_ptr.vmem [resolvable:$true] %s131
      %137 = dma.vmem_to_hbm [thread:$0]  %s132, 128, %s3, [#allocation4], 64, 64, 4
    $region25: #{tpu_custom_call.1} parent=1 // pred_fallthru
      _
    // Predicated region
    $region26: #{tpu_custom_call.1} parent=1 // pred_check
      _
    $region27: #{tpu_custom_call.1} parent=1 // pred_check_branch
      %139 = sbr.rel (0) target = $region29
    $region28: #{tpu_custom_call.1} parent=1 // pred_region
      %140 = dma.done [#allocation4], 128
    $region29: #{tpu_custom_call.1} parent=1 // pred_fallthru
      _
    %141 = vsyncpa [#allocation3], 1
    %142 = vsyncpa [#allocation6], 1
    %143 = vsyncpa [#allocation4], 1

</llo_original>
